<compile_context>
chip_gen: v7x
topology: tpu7x:2x2x1
jax: 0.10.0
libtpu: 0.0.40
codegen_flags: <defaults>
</compile_context>

<pallas_src>
import functools

import jax
import jax.numpy as jnp
from jax.experimental import pallas as pl
from jax.experimental.pallas import tpu as pltpu

BN_EPS = 1e-5       # nn.BatchNorm1d default
NORM_EPS = 1e-12    # F.normalize default


def classifier_kernel(x_ref, w1_ref, gamma_ref, beta_ref, w2_ref, b2_ref,
                      out_ref):
    # ---- Linear 1 (bias dropped: it cancels in training-mode BN) ----
    x = x_ref[...]
    h = jnp.dot(x, w1_ref[...], preferred_element_type=jnp.float32)

    # ---- BatchNorm1d (training mode, biased variance), two-pass stats ----
    inv_n = 1.0 / h.shape[0]
    mean = jnp.sum(h, axis=0, keepdims=True) * inv_n
    centered = h - mean
    var = jnp.sum(centered * centered, axis=0, keepdims=True) * inv_n
    inv_std = jax.lax.rsqrt(var + BN_EPS)                     # EUP
    scale = gamma_ref[...] * inv_std                          # (1, hid_p)

    # ---- BN apply + ReLU (pad lanes: gamma=0, beta=0 -> stay exactly 0) ----
    hr = jnp.maximum(centered * scale + beta_ref[...], 0.0)

    # ---- Linear 2 ----
    y = jnp.dot(hr, w2_ref[...], preferred_element_type=jnp.float32) + b2_ref[...]

    # ---- F.normalize(dim=1): y / max(||y||, eps) via a single rsqrt ----
    sumsq = jnp.sum(y * y, axis=1, keepdims=True)
    inv_norm = jax.lax.rsqrt(jnp.maximum(sumsq, NORM_EPS * NORM_EPS))  # EUP
    out_ref[...] = (y * inv_norm).astype(out_ref.dtype)


def _round_up(v, m):
    return ((v + m - 1) // m) * m


def prepare_params(w1, b1, gamma, beta, w2, b2):
    """One-time preprocessing: transpose weights to (in, out) layout and
    zero-pad hidden/output feature dims to multiples of 128 (lane-dense).

    b1 is accepted for API parity with the PyTorch module but intentionally
    discarded: Linear bias feeding training-mode BatchNorm cancels exactly.
    Padded gamma/beta lanes are zero so pad columns stay exactly zero through
    BN/ReLU; padded w2 rows/columns are zero, so padding never changes the
    real outputs."""
    del b1
    in_fea = w1.shape[1]
    hid_fea = w1.shape[0]
    out_fea = w2.shape[0]
    hid_p = _round_up(hid_fea, 128)
    out_p = _round_up(out_fea, 128)

    w1_t = jnp.zeros((in_fea, hid_p), jnp.float32).at[:, :hid_fea].set(
        jnp.asarray(w1, jnp.float32).T)
    g_r = jnp.zeros((1, hid_p), jnp.float32).at[:, :hid_fea].set(
        jnp.asarray(gamma, jnp.float32))
    be_r = jnp.zeros((1, hid_p), jnp.float32).at[:, :hid_fea].set(
        jnp.asarray(beta, jnp.float32))
    w2_t = jnp.zeros((hid_p, out_p), jnp.float32).at[:hid_fea, :out_fea].set(
        jnp.asarray(w2, jnp.float32).T)
    b2_r = jnp.zeros((1, out_p), jnp.float32).at[:, :out_fea].set(
        jnp.asarray(b2, jnp.float32))

    params = (w1_t, g_r, be_r, w2_t, b2_r)
    # Materialize once on device so the per-call path never re-pads.
    return tuple(jax.device_put(p) for p in params), out_fea


@functools.partial(jax.jit, static_argnames=("out_fea",))
def classifier_forward(x, params, out_fea):
    """x: (N, in_fea); params: output of prepare_params."""
    x = jnp.asarray(x, jnp.float32)
    n, in_fea = x.shape
    w1_t, g_r, be_r, w2_t, b2_r = params
    hid_p = w1_t.shape[1]
    out_p = w2_t.shape[1]

    args = (x, w1_t, g_r, be_r, w2_t, b2_r)
    full = lambda a: pl.BlockSpec(a.shape, lambda: (0,) * a.ndim,
                                  memory_space=pltpu.VMEM)

    flops = (2 * n * in_fea * hid_p + 2 * n * hid_p * out_p
             + 8 * n * hid_p + 3 * n * out_p)
    bytes_accessed = 4 * (x.size + w1_t.size + w2_t.size
                          + 3 * hid_p + out_p + n * out_p)

    y_pad = pl.pallas_call(
        classifier_kernel,
        out_shape=jax.ShapeDtypeStruct((n, out_p), jnp.float32),
        grid=(),
        in_specs=[full(a) for a in args],
        out_specs=pl.BlockSpec((n, out_p), lambda: (0, 0),
                               memory_space=pltpu.VMEM),
        compiler_params=pltpu.CompilerParams(vmem_limit_bytes=32 << 20),
        cost_estimate=pl.CostEstimate(flops=flops,
                                      transcendentals=n + hid_p,
                                      bytes_accessed=bytes_accessed),
    )(*args)

    # Slice the lane padding back off (a view-level slice under jit).
    return y_pad[:, :out_fea]


def reference_forward(x, w1, b1, gamma, beta, w2, b2):
    h = x @ w1.T + b1
    mean = h.mean(axis=0, keepdims=True)
    var = ((h - mean) ** 2).mean(axis=0, keepdims=True)
    hn = (h - mean) / jnp.sqrt(var + BN_EPS) * gamma + beta
    y = jnp.maximum(hn, 0.0) @ w2.T + b2
    norm = jnp.maximum(jnp.linalg.norm(y, axis=1, keepdims=True), NORM_EPS)
    return y / norm


if __name__ == "__main__":
    in_fea, hid_fea, out_fea, batch = 32, 64, 16, 8

    key = jax.random.PRNGKey(0)
    ks = jax.random.split(key, 6)
    # Deterministic synthetic parameters (Linear-like uniform init).
    lim1 = 1.0 / jnp.sqrt(in_fea)
    lim2 = 1.0 / jnp.sqrt(hid_fea)
    w1 = jax.random.uniform(ks[0], (hid_fea, in_fea), jnp.float32, -lim1, lim1)
    b1 = jax.random.uniform(ks[1], (hid_fea,), jnp.float32, -lim1, lim1)
    w2 = jax.random.uniform(ks[2], (out_fea, hid_fea), jnp.float32, -lim2, lim2)
    b2 = jax.random.uniform(ks[3], (out_fea,), jnp.float32, -lim2, lim2)
    gamma = jnp.ones((hid_fea,), jnp.float32)   # BatchNorm1d init
    beta = jnp.zeros((hid_fea,), jnp.float32)

    x = jax.random.normal(ks[4], (batch, in_fea), jnp.float32)

    # One-time preprocessing (hoisted out of the forward path).
    params, out_dim = prepare_params(w1, b1, gamma, beta, w2, b2)

    z = classifier_forward(x, params, out_dim)
    jax.block_until_ready(z)

    z_ref = reference_forward(x, w1, b1, gamma, beta, w2, b2)
    assert z.shape == (batch, out_fea)
    assert jnp.allclose(z, z_ref, atol=1e-5, rtol=1e-5), "mismatch vs reference"

    print("KERNEL_OK")
</pallas_src>

<mosaic_0001>
module attributes {stable_mosaic.version = 11 : i64} {
  func.func @classifier_kernel(%arg0: memref<8x32xf32, #tpu.memory_space<vmem>>, %arg1: memref<32x128xf32, #tpu.memory_space<vmem>>, %arg2: memref<1x128xf32, #tpu.memory_space<vmem>>, %arg3: memref<1x128xf32, #tpu.memory_space<vmem>>, %arg4: memref<128x128xf32, #tpu.memory_space<vmem>>, %arg5: memref<1x128xf32, #tpu.memory_space<vmem>>, %arg6: memref<8x128xf32, #tpu.memory_space<vmem>>) attributes {dimension_semantics = [], scalar_prefetch = 0 : i64, scratch_operands = 0 : i64, tpu.core_type = #tpu.core_type<tc>} {
    %c0 = arith.constant 0 : index
    %c0_0 = arith.constant 0 : index
    %0 = vector.load %arg0[%c0, %c0_0] : memref<8x32xf32, #tpu.memory_space<vmem>>, vector<8x32xf32>
    %c0_1 = arith.constant 0 : index
    %c0_2 = arith.constant 0 : index
    %1 = vector.load %arg1[%c0_1, %c0_2] : memref<32x128xf32, #tpu.memory_space<vmem>>, vector<32x128xf32>
    %cst = arith.constant dense<0.000000e+00> : vector<8x128xf32>
    %2 = tpu.matmul %0, %1, %cst {dimension_numbers = #tpu.dot_dimension_numbers<[1], [0], [0], [1], [0, 0, 1, 1], [], []>} : vector<8x32xf32>, vector<32x128xf32>, vector<8x128xf32> -> vector<8x128xf32>
    %cst_3 = arith.constant dense<0.000000e+00> : vector<128xf32>
    %3 = vector.multi_reduction <add>, %2, %cst_3 [0] : vector<8x128xf32> to vector<128xf32>
    %4 = vector.shape_cast %3 : vector<128xf32> to vector<1x128xf32>
    %cst_4 = arith.constant 1.250000e-01 : f32
    %5 = vector.broadcast %cst_4 : f32 to vector<1x128xf32>
    %6 = arith.mulf %4, %5 : vector<1x128xf32>
    %7 = vector.broadcast %6 : vector<1x128xf32> to vector<8x128xf32>
    %8 = arith.subf %2, %7 : vector<8x128xf32>
    %9 = arith.mulf %8, %8 : vector<8x128xf32>
    %cst_5 = arith.constant dense<0.000000e+00> : vector<128xf32>
    %10 = vector.multi_reduction <add>, %9, %cst_5 [0] : vector<8x128xf32> to vector<128xf32>
    %11 = vector.shape_cast %10 : vector<128xf32> to vector<1x128xf32>
    %cst_6 = arith.constant 1.250000e-01 : f32
    %12 = vector.broadcast %cst_6 : f32 to vector<1x128xf32>
    %13 = arith.mulf %11, %12 : vector<1x128xf32>
    %cst_7 = arith.constant 9.99999974E-6 : f32
    %14 = vector.broadcast %cst_7 : f32 to vector<1x128xf32>
    %15 = arith.addf %13, %14 : vector<1x128xf32>
    %16 = math.rsqrt %15 : vector<1x128xf32>
    %c0_8 = arith.constant 0 : index
    %c0_9 = arith.constant 0 : index
    %17 = vector.load %arg2[%c0_8, %c0_9] : memref<1x128xf32, #tpu.memory_space<vmem>>, vector<1x128xf32>
    %18 = arith.mulf %17, %16 : vector<1x128xf32>
    %19 = vector.broadcast %18 : vector<1x128xf32> to vector<8x128xf32>
    %20 = arith.mulf %8, %19 : vector<8x128xf32>
    %c0_10 = arith.constant 0 : index
    %c0_11 = arith.constant 0 : index
    %21 = vector.load %arg3[%c0_10, %c0_11] : memref<1x128xf32, #tpu.memory_space<vmem>>, vector<1x128xf32>
    %22 = vector.broadcast %21 : vector<1x128xf32> to vector<8x128xf32>
    %23 = arith.addf %20, %22 : vector<8x128xf32>
    %cst_12 = arith.constant 0.000000e+00 : f32
    %24 = vector.broadcast %cst_12 : f32 to vector<8x128xf32>
    %25 = arith.maximumf %23, %24 : vector<8x128xf32>
    %c0_13 = arith.constant 0 : index
    %c0_14 = arith.constant 0 : index
    %26 = vector.load %arg4[%c0_13, %c0_14] : memref<128x128xf32, #tpu.memory_space<vmem>>, vector<128x128xf32>
    %cst_15 = arith.constant dense<0.000000e+00> : vector<8x128xf32>
    %27 = tpu.matmul %25, %26, %cst_15 {dimension_numbers = #tpu.dot_dimension_numbers<[1], [0], [0], [1], [0, 0, 1, 1], [], []>} : vector<8x128xf32>, vector<128x128xf32>, vector<8x128xf32> -> vector<8x128xf32>
    %c0_16 = arith.constant 0 : index
    %c0_17 = arith.constant 0 : index
    %28 = vector.load %arg5[%c0_16, %c0_17] : memref<1x128xf32, #tpu.memory_space<vmem>>, vector<1x128xf32>
    %29 = vector.broadcast %28 : vector<1x128xf32> to vector<8x128xf32>
    %30 = arith.addf %27, %29 : vector<8x128xf32>
    %31 = arith.mulf %30, %30 : vector<8x128xf32>
    %cst_18 = arith.constant dense<0.000000e+00> : vector<8xf32>
    %32 = vector.multi_reduction <add>, %31, %cst_18 [1] : vector<8x128xf32> to vector<8xf32>
    %33 = vector.shape_cast %32 : vector<8xf32> to vector<8x1xf32>
    %cst_19 = arith.constant 1.000000e-24 : f32
    %34 = vector.broadcast %cst_19 : f32 to vector<8x1xf32>
    %35 = arith.maximumf %33, %34 : vector<8x1xf32>
    %36 = math.rsqrt %35 : vector<8x1xf32>
    %37 = vector.broadcast %36 : vector<8x1xf32> to vector<8x128xf32>
    %38 = arith.mulf %30, %37 : vector<8x128xf32>
    %c0_20 = arith.constant 0 : index
    %c0_21 = arith.constant 0 : index
    %39 = vector.load %arg6[%c0_20, %c0_21] : memref<8x128xf32, #tpu.memory_space<vmem>>, vector<8x128xf32>
    tpu.vector_store %arg6[%c0_20, %c0_21], %38 {strides = array<i32>} : memref<8x128xf32, #tpu.memory_space<vmem>>, vector<8x128xf32>,
    return
  }
}

</mosaic_0001>

<llo_original>
// kernel: classifier_forward.1
$region0: #{classifier_forward.1}
  #allocation0 [shape = 'u32[]', space=smem, size = 0x4, offset = 0x4, fixed_abs, tag = 'smem constant byte address 0x4 - core index']
  #allocation1 [shape = 'u32[144,128]{1,0:T(1,128)}', space=vmem, size = 0x12000, scoped, tag = 'internal scratch']
  %s0 = inlined_call_operand.hbm [shape: f32[8,32], index: 0, kind: input, shape index: {}]
  %s1 = inlined_call_operand.hbm [shape: f32[32,128], index: 1, kind: input, shape index: {}]
  %s2 = inlined_call_operand.vmem [shape: f32[1,128], index: 2, kind: input, shape index: {}]
  %s3 = inlined_call_operand.vmem [shape: f32[1,128], index: 3, kind: input, shape index: {}]
  %s4 = inlined_call_operand.hbm [shape: f32[128,128], index: 4, kind: input, shape index: {}]
  %s5 = inlined_call_operand.vmem [shape: f32[1,128], index: 5, kind: input, shape index: {}]
  %s6 = inlined_call_operand.hbm [shape: f32[8,128], index: 6, kind: output, shape index: {}]
  %s7 = sld [smem:[#allocation0]]
  $region46: #{classifier_forward.1} parent=0
    _
  %s9 = ssub.s32 1, %s7
  %s10 = scalar_select 0, %s9, %s7
  $region1: #{classifier_forward.1} parent=0
    #allocation2 [shape = 'u8[4096]{0}', space=vmem, size = 0x1000, scoped, tag = 'input window, operand 0, single buffered']
    #allocation3 [shape = 's32[1]{0}', space=sflag, size = 0x4, scoped, tag = 'scoped memory for classifier_forward.1']
    #allocation4 [shape = 's32[1]{0}', space=sflag, size = 0x4, scoped, tag = 'scoped memory for classifier_forward.1']
    #allocation5 [shape = 'u8[16384]{0}', space=vmem, size = 0x4000, scoped, tag = 'input window, operand 1, single buffered']
    #allocation6 [shape = 's32[1]{0}', space=sflag, size = 0x4, scoped, tag = 'scoped memory for classifier_forward.1']
    #allocation7 [shape = 'u8[65536]{0}', space=vmem, size = 0x10000, scoped, tag = 'input window, operand 4, single buffered']
    #allocation8 [shape = 'u8[4096]{0}', space=vmem, size = 0x1000, scoped, tag = 'output window, operand 0, single buffered']
    %11 = vsyncpa [#allocation3], 0
    %12 = vsyncpa [#allocation6], 0
    %13 = vsyncpa [#allocation4], 0
    // Predicated region
    $region2: #{classifier_forward.1} parent=1 // pred_check
      _
    $region3: #{classifier_forward.1} parent=1 // pred_check_branch
      %15 = sbr.rel (0) target = $region5
    $region4: #{classifier_forward.1} parent=1 // pred_region
      %s17 = ssub.s32 128, 128
      %18 = vsyncadd [#allocation3], %s17
      %s20 = sshll.u32 [#allocation2], 4
      %s21 = int_to_ptr.vmem [resolvable:$true] %s20
      %23 = dma.hbm_to_vmem [thread:$0]  %s0, 128, %s21, [#allocation3]
    $region5: #{classifier_forward.1} parent=1 // pred_fallthru
      _
    // Predicated region
    $region6: #{classifier_forward.1} parent=1 // pred_check
      _
    $region7: #{classifier_forward.1} parent=1 // pred_check_branch
      %25 = sbr.rel (0) target = $region9
    $region8: #{classifier_forward.1} parent=1 // pred_region
      %s27 = ssub.s32 512, 512
      %28 = vsyncadd [#allocation6], %s27
      %s29 = sshll.u32 [#allocation5], 4
      %s30 = int_to_ptr.vmem [resolvable:$true] %s29
      %35 = dma.hbm_to_vmem [thread:$0]  %s1, 512, %s30, [#allocation6], 128, 128, 8
    $region9: #{classifier_forward.1} parent=1 // pred_fallthru
      _
    // Predicated region
    $region10: #{classifier_forward.1} parent=1 // pred_check
      _
    $region11: #{classifier_forward.1} parent=1 // pred_check_branch
      %37 = sbr.rel (0) target = $region13
    $region12: #{classifier_forward.1} parent=1 // pred_region
      _
    $region13: #{classifier_forward.1} parent=1 // pred_fallthru
      _
    // Predicated region
    $region14: #{classifier_forward.1} parent=1 // pred_check
      _
    $region15: #{classifier_forward.1} parent=1 // pred_check_branch
      %39 = sbr.rel (0) target = $region17
    $region16: #{classifier_forward.1} parent=1 // pred_region
      _
    $region17: #{classifier_forward.1} parent=1 // pred_fallthru
      _
    // Predicated region
    $region18: #{classifier_forward.1} parent=1 // pred_check
      _
    $region19: #{classifier_forward.1} parent=1 // pred_check_branch
      %41 = sbr.rel (0) target = $region21
    $region20: #{classifier_forward.1} parent=1 // pred_region
      %s43 = ssub.s32 2048, 2048
      %44 = vsyncadd [#allocation6], %s43
      %s45 = sshll.u32 [#allocation7], 4
      %s46 = int_to_ptr.vmem [resolvable:$true] %s45
      %51 = dma.hbm_to_vmem [thread:$0]  %s4, 2048, %s46, [#allocation6], 128, 128, 8
    $region21: #{classifier_forward.1} parent=1 // pred_fallthru
      _
    // Predicated region
    $region22: #{classifier_forward.1} parent=1 // pred_check
      _
    $region23: #{classifier_forward.1} parent=1 // pred_check_branch
      %53 = sbr.rel (0) target = $region25
    $region24: #{classifier_forward.1} parent=1 // pred_region
      _
    $region25: #{classifier_forward.1} parent=1 // pred_fallthru
      _
    // Predicated region
    $region26: #{classifier_forward.1} parent=1 // pred_check
      _
    $region27: #{classifier_forward.1} parent=1 // pred_check_branch
      %55 = sbr.rel (0) target = $region29
    $region28: #{classifier_forward.1} parent=1 // pred_region
      %56 = dma.done [#allocation3], 128
    $region29: #{classifier_forward.1} parent=1 // pred_fallthru
      _
    // Predicated region
    $region30: #{classifier_forward.1} parent=1 // pred_check
      _
    $region31: #{classifier_forward.1} parent=1 // pred_check_branch
      %58 = sbr.rel (0) target = $region33
    $region32: #{classifier_forward.1} parent=1 // pred_region
      %59 = dma.done [#allocation6], 512
    $region33: #{classifier_forward.1} parent=1 // pred_fallthru
      _
    // Predicated region
    $region34: #{classifier_forward.1} parent=1 // pred_check
      _
    $region35: #{classifier_forward.1} parent=1 // pred_check_branch
      %61 = sbr.rel (0) target = $region37
    $region36: #{classifier_forward.1} parent=1 // pred_region
      %62 = dma.done [#allocation6], 2048
    $region37: #{classifier_forward.1} parent=1 // pred_fallthru
      _
    %v63 = vld [vmem:[#allocation2] sm:$0xff]
    %v64 = vld [vmem:[#allocation5] sm:$0xff]
    %v65 = vld [vmem:[#allocation5 + $0x8] sm:$0xff]
    %v66 = vld [vmem:[#allocation5 + $0x10] sm:$0xff]
    %v67 = vld [vmem:[#allocation5 + $0x18] sm:$0xff]
    %vm68 = vcmask 261120
    %v70 = vsel %vm68, %v63, 0
    %72 = vmatprep.subr.mxu0 0.0
    %73 = vmatpush1.msra.mxu0 %v64
    %74 = vmatprep.subr.mxu0 0.0
    %75 = vmatpush1.msra.mxu0 %v65
    %76 = vmatprep.subr.mxu0 0.0
    %77 = vmatpush1.msra.mxu0 %v66
    %78 = vmatprep.subr.mxu0 0.0
    %79 = vmatpush1.msra.mxu0 %v67
    %80 = vmatprep.subr.mxu0 0.0
    %81 = vmatpush1.msra.mxu0 0.0
    %82 = vmatprep.subr.mxu0 0.0
    %83 = vmatpush1.msra.mxu0 0.0
    %84 = vmatprep.subr.mxu0 0.0
    %85 = vmatpush1.msra.mxu0 0.0
    %86 = vmatprep.subr.mxu0 0.0
    %87 = vmatpush1.msra.mxu0 0.0
    %88 = vmatprep.subr.mxu0 0.0
    %89 = vmatpush1.msra.mxu0 0.0
    %90 = vmatprep.subr.mxu0 0.0
    %91 = vmatpush1.msra.mxu0 0.0
    %92 = vmatprep.subr.mxu0 0.0
    %93 = vmatpush1.msra.mxu0 0.0
    %94 = vmatprep.subr.mxu0 0.0
    %95 = vmatpush1.msra.mxu0 0.0
    %96 = vmatprep.subr.mxu0 0.0
    %97 = vmatpush1.msra.mxu0 0.0
    %98 = vmatprep.subr.mxu0 0.0
    %99 = vmatpush1.msra.mxu0 0.0
    %100 = vmatprep.subr.mxu0 0.0
    %101 = vmatpush1.msra.mxu0 0.0
    %102 = vmatprep.subr.mxu0 0.0
    %103 = vmatpush1.msra.mxu0 0.0
    %104 = vmatprep.subr.mxu0 0.0
    %105 = vmatpush1.msra.mxu0 0.0
    %106 = vmatprep.subr.mxu0 0.0
    %107 = vmatpush1.msra.mxu0 0.0
    %108 = vmatprep.subr.mxu0 0.0
    %109 = vmatpush1.msra.mxu0 0.0
    %110 = vmatprep.subr.mxu0 0.0
    %111 = vmatpush1.msra.mxu0 0.0
    %112 = vmatprep.subr.mxu0 0.0
    %113 = vmatpush1.msra.mxu0 0.0
    %114 = vmatprep.subr.mxu0 0.0
    %115 = vmatpush1.msra.mxu0 0.0
    %116 = vmatprep.subr.mxu0 0.0
    %117 = vmatpush1.msra.mxu0 0.0
    %118 = vmatprep.subr.mxu0 0.0
    %119 = vmatpush1.msra.mxu0 0.0
    %120 = vmatprep.subr.mxu0 0.0
    %121 = vmatpush1.msra.mxu0 0.0
    %122 = vmatprep.subr.mxu0 0.0
    %123 = vmatpush1.msra.mxu0 0.0
    %124 = vmatprep.subr.mxu0 0.0
    %125 = vmatpush1.msra.mxu0 0.0
    %126 = vmatprep.subr.mxu0 0.0
    %127 = vmatpush1.msra.mxu0 0.0
    %128 = vmatprep.subr.mxu0 0.0
    %129 = vmatpush1.msra.mxu0 0.0
    %130 = vmatprep.subr.mxu0 0.0
    %131 = vmatpush1.msra.mxu0 0.0
    %132 = vmatprep.subr.mxu0 0.0
    %133 = vmatpush1.msra.mxu0 0.0
    %134 = vmatprep.subr.mxu0 0.0
    %135 = vmatpush1.msra.mxu0 0.0
    %136 = vmatprep.mubr.f32.mxu0 0.0
    %137 = vmatmul.mubr.f32.gmra.mrb[0].mxu0 %v70
    %v138 = vpop.f32.mrb[0].mxu0
    %v139 = vadd.f32 0.0, %v138
    %v140 = vpop.f32.mrb[0].mxu0
    %141 = vdwg.mxu0
    %v142 = vrot.slane %v139, 4
    %v143 = vadd.f32 %v139, %v142
    %v144 = vrot.slane %v143, 2
    %v145 = vadd.f32 %v143, %v144
    %v146 = vrot.slane %v145, 1
    %v147 = vadd.f32 %v145, %v146
    %v148 = vmul.f32 %v147, 0.125
    %v149 = vsub.f32 %v139, %v148
    %v150 = vmul.f32 %v149, %v149
    %v151 = vrot.slane %v150, 4
    %v152 = vadd.f32 %v150, %v151
    %v153 = vrot.slane %v152, 2
    %v154 = vadd.f32 %v152, %v153
    %v155 = vrot.slane %v154, 1
    %v156 = vadd.f32 %v154, %v155
    %v157 = vmul.f32 %v156, 0.125
    %v158 = vadd.f32 %v157, 1e-05
    %v159 = vrsqrt.pop %v158
    %v160 = vld [vmem:[%s2] sm:$0x1]
    %v161 = vmul.f32 %v160, %v159
    %v163 = vlaneseq
    %v164 = vshrl.u32 %v163, 7
    %v165 = vsub.s32 0, %v164
    %v166 = vrot.slane %v161, %v165
    %v168 = vmul.f32 %v149, %v166
    %v169 = vld [vmem:[%s3] sm:$0x1]
    %v171 = vlaneseq
    %v172 = vshrl.u32 %v171, 7
    %v173 = vsub.s32 0, %v172
    %v174 = vrot.slane %v169, %v173
    %v176 = vadd.f32 %v168, %v174
    %v177 = vmax.f32 %v176, 0.0
    %v178 = vld [vmem:[#allocation7] sm:$0xff]
    %v179 = vld [vmem:[#allocation7 + $0x8] sm:$0xff]
    %v180 = vld [vmem:[#allocation7 + $0x10] sm:$0xff]
    %v181 = vld [vmem:[#allocation7 + $0x18] sm:$0xff]
    %v182 = vld [vmem:[#allocation7 + $0x20] sm:$0xff]
    %v183 = vld [vmem:[#allocation7 + $0x28] sm:$0xff]
    %v184 = vld [vmem:[#allocation7 + $0x30] sm:$0xff]
    %v185 = vld [vmem:[#allocation7 + $0x38] sm:$0xff]
    %v186 = vld [vmem:[#allocation7 + $0x40] sm:$0xff]
    %v187 = vld [vmem:[#allocation7 + $0x48] sm:$0xff]
    %v188 = vld [vmem:[#allocation7 + $0x50] sm:$0xff]
    %v189 = vld [vmem:[#allocation7 + $0x58] sm:$0xff]
    %v190 = vld [vmem:[#allocation7 + $0x60] sm:$0xff]
    %v191 = vld [vmem:[#allocation7 + $0x68] sm:$0xff]
    %v192 = vld [vmem:[#allocation7 + $0x70] sm:$0xff]
    %v193 = vld [vmem:[#allocation7 + $0x78] sm:$0xff]
    %v194 = vld [vmem:[%s5] sm:$0x1]
    %v196 = vlaneseq
    %v197 = vshrl.u32 %v196, 7
    %v198 = vsub.s32 0, %v197
    %v199 = vrot.slane %v194, %v198
    %201 = vmatprep.subr.mxu0 0.0
    %202 = vmatpush1.msra.mxu0 %v178
    %203 = vmatprep.subr.mxu0 0.0
    %204 = vmatpush1.msra.mxu0 %v179
    %205 = vmatprep.subr.mxu0 0.0
    %206 = vmatpush1.msra.mxu0 %v180
    %207 = vmatprep.subr.mxu0 0.0
    %208 = vmatpush1.msra.mxu0 %v181
    %209 = vmatprep.subr.mxu0 0.0
    %210 = vmatpush1.msra.mxu0 %v182
    %211 = vmatprep.subr.mxu0 0.0
    %212 = vmatpush1.msra.mxu0 %v183
    %213 = vmatprep.subr.mxu0 0.0
    %214 = vmatpush1.msra.mxu0 %v184
    %215 = vmatprep.subr.mxu0 0.0
    %216 = vmatpush1.msra.mxu0 %v185
    %217 = vmatprep.subr.mxu0 0.0
    %218 = vmatpush1.msra.mxu0 %v186
    %219 = vmatprep.subr.mxu0 0.0
    %220 = vmatpush1.msra.mxu0 %v187
    %221 = vmatprep.subr.mxu0 0.0
    %222 = vmatpush1.msra.mxu0 %v188
    %223 = vmatprep.subr.mxu0 0.0
    %224 = vmatpush1.msra.mxu0 %v189
    %225 = vmatprep.subr.mxu0 0.0
    %226 = vmatpush1.msra.mxu0 %v190
    %227 = vmatprep.subr.mxu0 0.0
    %228 = vmatpush1.msra.mxu0 %v191
    %229 = vmatprep.subr.mxu0 0.0
    %230 = vmatpush1.msra.mxu0 %v192
    %231 = vmatprep.subr.mxu0 0.0
    %232 = vmatpush1.msra.mxu0 %v193
    %233 = vmatprep.subr.mxu0 0.0
    %234 = vmatpush1.msra.mxu0 0.0
    %235 = vmatprep.subr.mxu0 0.0
    %236 = vmatpush1.msra.mxu0 0.0
    %237 = vmatprep.subr.mxu0 0.0
    %238 = vmatpush1.msra.mxu0 0.0
    %239 = vmatprep.subr.mxu0 0.0
    %240 = vmatpush1.msra.mxu0 0.0
    %241 = vmatprep.subr.mxu0 0.0
    %242 = vmatpush1.msra.mxu0 0.0
    %243 = vmatprep.subr.mxu0 0.0
    %244 = vmatpush1.msra.mxu0 0.0
    %245 = vmatprep.subr.mxu0 0.0
    %246 = vmatpush1.msra.mxu0 0.0
    %247 = vmatprep.subr.mxu0 0.0
    %248 = vmatpush1.msra.mxu0 0.0
    %249 = vmatprep.subr.mxu0 0.0
    %250 = vmatpush1.msra.mxu0 0.0
    %251 = vmatprep.subr.mxu0 0.0
    %252 = vmatpush1.msra.mxu0 0.0
    %253 = vmatprep.subr.mxu0 0.0
    %254 = vmatpush1.msra.mxu0 0.0
    %255 = vmatprep.subr.mxu0 0.0
    %256 = vmatpush1.msra.mxu0 0.0
    %257 = vmatprep.subr.mxu0 0.0
    %258 = vmatpush1.msra.mxu0 0.0
    %259 = vmatprep.subr.mxu0 0.0
    %260 = vmatpush1.msra.mxu0 0.0
    %261 = vmatprep.subr.mxu0 0.0
    %262 = vmatpush1.msra.mxu0 0.0
    %263 = vmatprep.subr.mxu0 0.0
    %264 = vmatpush1.msra.mxu0 0.0
    %265 = vmatprep.mubr.f32.mxu0 0.0
    %266 = vmatmul.mubr.f32.gmra.mrb[0].mxu0 %v177
    %v267 = vpop.f32.mrb[0].mxu0
    %v268 = vadd.f32 %v199, %v267
    %v269 = vpop.f32.mrb[0].mxu0
    %270 = vdwg.mxu0
    %v271 = vmul.f32 %v268, %v268
    %272 = vadd.xlane.f32.xlu0 %v271
    %v273 = vpop.xlane.xlu0 %272
    %v274 = vmax.f32 %v273, 1e-24
    %v275 = vrsqrt.pop %v274
    %v276 = vmul.f32 %v268, %v275
    %277 = vst [vmem:[#allocation8] sm:$0xff] %v276
    // Predicated region
    $region38: #{classifier_forward.1} parent=1 // pred_check
      _
    $region39: #{classifier_forward.1} parent=1 // pred_check_branch
      %279 = sbr.rel (0) target = $region41
    $region40: #{classifier_forward.1} parent=1 // pred_region
      %s281 = ssub.s32 128, 128
      %282 = vsyncadd [#allocation4], %s281
      %s284 = sshll.u32 [#allocation8], 4
      %s285 = int_to_ptr.vmem [resolvable:$true] %s284
      %287 = dma.vmem_to_hbm [thread:$0]  %s285, 128, %s6, [#allocation4]
    $region41: #{classifier_forward.1} parent=1 // pred_fallthru
      _
    // Predicated region
    $region42: #{classifier_forward.1} parent=1 // pred_check
      _
    $region43: #{classifier_forward.1} parent=1 // pred_check_branch
      %289 = sbr.rel (0) target = $region45
    $region44: #{classifier_forward.1} parent=1 // pred_region
      %290 = dma.done [#allocation4], 128
    $region45: #{classifier_forward.1} parent=1 // pred_fallthru
      _
    %291 = vsyncpa [#allocation3], 1
    %292 = vsyncpa [#allocation6], 1
    %293 = vsyncpa [#allocation4], 1

</llo_original>
